<compile_context>
chip_gen: v5e
topology: v5e:2x2
jax: 0.10.0
libtpu: 0.0.40
codegen_flags: <defaults>
</compile_context>

<pallas_src>
import functools

import jax
import jax.numpy as jnp
from jax.experimental import pallas as pl
from jax.experimental.pallas import tpu as pltpu

_VMEM_LIMIT_BYTES = 40 * 1024 * 1024  # safe on v5e/v6e (128 MiB) and v7x (64 MiB/TC)


def _round_up(n, m):
    return ((n + m - 1) // m) * m


def _choose_tile(batch, tile_b, min_steps=4):
    """Pick a lane-aligned batch tile.

    - batch is padded up to a multiple of 128 lanes,
    - the tile is a multiple of 128 and never larger than the padded batch,
    - when the batch is big enough, the tile is capped so the grid has at least
      `min_steps` steps (megacore split on v7x + double-buffering overlap).
    """
    b128 = _round_up(max(int(batch), 1), 128)
    tb = max(128, (int(tile_b) // 128) * 128)
    tb = min(tb, b128)
    if b128 >= min_steps * 128:
        tb = min(tb, _round_up(pl.cdiv(b128, min_steps), 128))
    b_pad = _round_up(b128, tb)
    return tb, b_pad


def _mlp_kernel_bm(x_ref, w1_ref, b1_ref, w2_ref, b2_ref, w3_ref, b3_ref, o_ref):
    """Batch-major input tile (TB, 10).

    Compute is done transposed (features on sublanes, batch on lanes) so every
    intermediate and the (2, TB) output tile are lane-dense (unmasked stores).
    """
    x = x_ref[...]                                                     # (TB, 10)
    # h1^T = W1 @ x^T + b1   (contraction on the shared 10-feature axis)
    h1 = jnp.einsum("oi,bi->ob", w1_ref[...], x,
                    preferred_element_type=jnp.float32) + b1_ref[...]   # (10, TB)
    h1 = jnp.maximum(h1, 0.0)
    h2 = jnp.dot(w2_ref[...], h1,
                 preferred_element_type=jnp.float32) + b2_ref[...]      # (5, TB)
    h2 = jnp.maximum(h2, 0.0)
    out = jnp.dot(w3_ref[...], h2,
                  preferred_element_type=jnp.float32) + b3_ref[...]     # (2, TB)
    o_ref[...] = out.astype(o_ref.dtype)


def _mlp_kernel_fm(x_ref, w1_ref, b1_ref, w2_ref, b2_ref, w3_ref, b3_ref, o_ref):
    """Feature-major input tile (10, TB): lane-dense in/out, no transposes at all."""
    x = x_ref[...]                                                      # (10, TB)
    h1 = jnp.dot(w1_ref[...], x,
                 preferred_element_type=jnp.float32) + b1_ref[...]      # (10, TB)
    h1 = jnp.maximum(h1, 0.0)
    h2 = jnp.dot(w2_ref[...], h1,
                 preferred_element_type=jnp.float32) + b2_ref[...]      # (5, TB)
    h2 = jnp.maximum(h2, 0.0)
    out = jnp.dot(w3_ref[...], h2,
                  preferred_element_type=jnp.float32) + b3_ref[...]     # (2, TB)
    o_ref[...] = out.astype(o_ref.dtype)


def _run_mlp(kernel, x_arr, x_block_shape, x_index_map, param_cols, tb, b_pad):
    w1, b1c, w2, b2c, w3, b3c = param_cols
    grid = (b_pad // tb,)
    return pl.pallas_call(
        kernel,
        out_shape=jax.ShapeDtypeStruct((2, b_pad), jnp.float32),
        grid=grid,
        in_specs=[
            pl.BlockSpec(x_block_shape, x_index_map),    # x tile (pipelined)
            pl.BlockSpec((10, 10), lambda i: (0, 0)),    # W1 -- constant index map:
            pl.BlockSpec((10, 1),  lambda i: (0, 0)),    # b1    stays VMEM-resident
            pl.BlockSpec((5, 10),  lambda i: (0, 0)),    # W2
            pl.BlockSpec((5, 1),   lambda i: (0, 0)),    # b2
            pl.BlockSpec((2, 5),   lambda i: (0, 0)),    # W3
            pl.BlockSpec((2, 1),   lambda i: (0, 0)),    # b3
        ],
        out_specs=pl.BlockSpec((2, tb), lambda i: (0, i)),   # lane-dense output
        compiler_params=pltpu.CompilerParams(
            dimension_semantics=("parallel",),               # megacore-shard batch
            vmem_limit_bytes=_VMEM_LIMIT_BYTES,
        ),
    )(x_arr, w1, b1c, w2, b2c, w3, b3c)


def _bias_cols(params):
    w1, b1, w2, b2, w3, b3 = params
    # Biases as (out, 1) columns: broadcast over the lane (batch) axis in-kernel.
    return (w1, b1.reshape(10, 1), w2, b2.reshape(5, 1), w3, b3.reshape(2, 1))


@functools.partial(jax.jit, static_argnames=("tile_b",))
def supervised_nn_forward(x, params, tile_b=16384):
    """PyTorch-compatible path. x: (B, ...) flattening to 10 features -> (B, 2).

    Keeps the batch-major HBM layout of x (no standalone wrapper transpose);
    the kernel computes in a transposed layout so its output tile is lane-dense.
    """
    B = x.shape[0]
    x2d = x.reshape(B, -1).astype(jnp.float32)            # nn.Flatten()
    assert x2d.shape[1] == 10, "flattened feature dim must be 10"

    cols = _bias_cols(params)
    tb, b_pad = _choose_tile(B, tile_b)
    if b_pad != B:
        x2d = jnp.pad(x2d, ((0, b_pad - B), (0, 0)))

    out_t = _run_mlp(_mlp_kernel_bm, x2d, (tb, 10), lambda i: (i, 0),
                     cols, tb, b_pad)
    # PyTorch semantics require (B, 2).  This final tiny (2, B) transpose should
    # be folded into the consumer (or avoided entirely via the feature-major
    # entry point below) when chasing end-to-end bandwidth.
    return out_t[:, :B].T


@functools.partial(jax.jit, static_argnames=("tile_b",))
def supervised_nn_forward_feature_major(x_t, params, tile_b=16384):
    """Streaming-optimal path. x_t: feature-major (10, B) -> logits (2, B).

    Fully lane-dense input/output blocks and no transposes anywhere; use this
    when the upstream producer can emit (10, B) (or reuses x across calls).
    """
    assert x_t.shape[0] == 10, "feature-major input must be (10, B)"
    B = x_t.shape[1]
    x_t = x_t.astype(jnp.float32)

    cols = _bias_cols(params)
    tb, b_pad = _choose_tile(B, tile_b)
    if b_pad != B:
        x_t = jnp.pad(x_t, ((0, 0), (0, b_pad - B)))

    out_t = _run_mlp(_mlp_kernel_fm, x_t, (10, tb), lambda i: (0, i),
                     cols, tb, b_pad)
    return out_t[:, :B]


def init_params(key):
    """PyTorch nn.Linear default init: U(-1/sqrt(fan_in), +1/sqrt(fan_in))."""
    def linear(key, out_f, in_f):
        kw, kb = jax.random.split(key)
        bound = 1.0 / jnp.sqrt(in_f)
        w = jax.random.uniform(kw, (out_f, in_f), jnp.float32, -bound, bound)
        b = jax.random.uniform(kb, (out_f,), jnp.float32, -bound, bound)
        return w, b

    k1, k2, k3 = jax.random.split(key, 3)
    w1, b1 = linear(k1, 10, 10)
    w2, b2 = linear(k2, 5, 10)
    w3, b3 = linear(k3, 2, 5)
    return (w1, b1, w2, b2, w3, b3)


def reference_forward(x, params):
    w1, b1, w2, b2, w3, b3 = params
    h = x.reshape(x.shape[0], -1).astype(jnp.float32)
    h = jnp.maximum(h @ w1.T + b1, 0.0)
    h = jnp.maximum(h @ w2.T + b2, 0.0)
    return h @ w3.T + b3


if __name__ == "__main__":
    key = jax.random.PRNGKey(0)
    k_param, k_x = jax.random.split(key)

    params = init_params(k_param)
    # Input: (batch=2, 2, 5) -> Flatten -> (2, 10)
    x = jax.random.normal(k_x, (2, 2, 5), dtype=jnp.float32)

    ref = reference_forward(x, params)

    # PyTorch-compatible path: (B, ...) -> (B, 2).
    out = jax.block_until_ready(supervised_nn_forward(x, params))
    assert out.shape == (2, 2), out.shape
    assert jnp.allclose(out, ref, atol=1e-5, rtol=1e-5), (out, ref)

    # Feature-major streaming path: (10, B) -> (2, B).
    out_fm = jax.block_until_ready(
        supervised_nn_forward_feature_major(x.reshape(2, -1).T, params))
    assert out_fm.shape == (2, 2), out_fm.shape
    assert jnp.allclose(out_fm.T, ref, atol=1e-5, rtol=1e-5), (out_fm, ref)

    print("KERNEL_OK")
</pallas_src>

<mosaic_0001>
module attributes {stable_mosaic.version = 11 : i64} {
  func.func @_mlp_kernel_bm(%arg0: i32, %arg1: memref<128x10xf32, #tpu.memory_space<vmem>>, %arg2: memref<10x10xf32, #tpu.memory_space<vmem>>, %arg3: memref<10x1xf32, #tpu.memory_space<vmem>>, %arg4: memref<5x10xf32, #tpu.memory_space<vmem>>, %arg5: memref<5x1xf32, #tpu.memory_space<vmem>>, %arg6: memref<2x5xf32, #tpu.memory_space<vmem>>, %arg7: memref<2x1xf32, #tpu.memory_space<vmem>>, %arg8: memref<2x128xf32, #tpu.memory_space<vmem>>) attributes {dimension_semantics = [#tpu.dimension_semantics<parallel>], iteration_bounds = array<i64: 1>, scalar_prefetch = 0 : i64, scratch_operands = 0 : i64, tpu.core_type = #tpu.core_type<tc>, window_params = [{transform_indices = @transform_0, window_bounds = array<i64: 128, 10>}, {pipeline_mode = #tpu.pipeline_mode<synchronous>, transform_indices = @transform_1, window_bounds = array<i64: 10, 10>}, {pipeline_mode = #tpu.pipeline_mode<synchronous>, transform_indices = @transform_2, window_bounds = array<i64: 10, 1>}, {pipeline_mode = #tpu.pipeline_mode<synchronous>, transform_indices = @transform_3, window_bounds = array<i64: 5, 10>}, {pipeline_mode = #tpu.pipeline_mode<synchronous>, transform_indices = @transform_4, window_bounds = array<i64: 5, 1>}, {pipeline_mode = #tpu.pipeline_mode<synchronous>, transform_indices = @transform_5, window_bounds = array<i64: 2, 5>}, {pipeline_mode = #tpu.pipeline_mode<synchronous>, transform_indices = @transform_6, window_bounds = array<i64: 2, 1>}, {transform_indices = @transform_7, window_bounds = array<i64: 2, 128>}]} {
    %c0 = arith.constant 0 : index
    %c0_0 = arith.constant 0 : index
    %0 = vector.load %arg1[%c0, %c0_0] : memref<128x10xf32, #tpu.memory_space<vmem>>, vector<128x10xf32>
    %c0_1 = arith.constant 0 : index
    %c0_2 = arith.constant 0 : index
    %1 = vector.load %arg2[%c0_1, %c0_2] : memref<10x10xf32, #tpu.memory_space<vmem>>, vector<10x10xf32>
    "tpu.trace_start"() <{level = 10 : i32, message = "oi,bi->ob"}> : () -> ()
    %cst = arith.constant dense<0.000000e+00> : vector<10x128xf32>
    %2 = tpu.matmul %1, %0, %cst {dimension_numbers = #tpu.dot_dimension_numbers<[1], [1], [0], [0], [0, 0, 1, 0], [], []>} : vector<10x10xf32>, vector<128x10xf32>, vector<10x128xf32> -> vector<10x128xf32>
    "tpu.trace_stop"() : () -> ()
    %c0_3 = arith.constant 0 : index
    %c0_4 = arith.constant 0 : index
    %3 = vector.load %arg3[%c0_3, %c0_4] : memref<10x1xf32, #tpu.memory_space<vmem>>, vector<10x1xf32>
    %4 = vector.broadcast %3 : vector<10x1xf32> to vector<10x128xf32>
    %5 = arith.addf %2, %4 : vector<10x128xf32>
    %cst_5 = arith.constant 0.000000e+00 : f32
    %6 = vector.broadcast %cst_5 : f32 to vector<10x128xf32>
    %7 = arith.maximumf %5, %6 : vector<10x128xf32>
    %c0_6 = arith.constant 0 : index
    %c0_7 = arith.constant 0 : index
    %8 = vector.load %arg4[%c0_6, %c0_7] : memref<5x10xf32, #tpu.memory_space<vmem>>, vector<5x10xf32>
    %cst_8 = arith.constant dense<0.000000e+00> : vector<5x128xf32>
    %9 = tpu.matmul %8, %7, %cst_8 {dimension_numbers = #tpu.dot_dimension_numbers<[1], [0], [0], [1], [0, 0, 1, 1], [], []>} : vector<5x10xf32>, vector<10x128xf32>, vector<5x128xf32> -> vector<5x128xf32>
    %c0_9 = arith.constant 0 : index
    %c0_10 = arith.constant 0 : index
    %10 = vector.load %arg5[%c0_9, %c0_10] : memref<5x1xf32, #tpu.memory_space<vmem>>, vector<5x1xf32>
    %11 = vector.broadcast %10 : vector<5x1xf32> to vector<5x128xf32>
    %12 = arith.addf %9, %11 : vector<5x128xf32>
    %cst_11 = arith.constant 0.000000e+00 : f32
    %13 = vector.broadcast %cst_11 : f32 to vector<5x128xf32>
    %14 = arith.maximumf %12, %13 : vector<5x128xf32>
    %c0_12 = arith.constant 0 : index
    %c0_13 = arith.constant 0 : index
    %15 = vector.load %arg6[%c0_12, %c0_13] : memref<2x5xf32, #tpu.memory_space<vmem>>, vector<2x5xf32>
    %cst_14 = arith.constant dense<0.000000e+00> : vector<2x128xf32>
    %16 = tpu.matmul %15, %14, %cst_14 {dimension_numbers = #tpu.dot_dimension_numbers<[1], [0], [0], [1], [0, 0, 1, 1], [], []>} : vector<2x5xf32>, vector<5x128xf32>, vector<2x128xf32> -> vector<2x128xf32>
    %c0_15 = arith.constant 0 : index
    %c0_16 = arith.constant 0 : index
    %17 = vector.load %arg7[%c0_15, %c0_16] : memref<2x1xf32, #tpu.memory_space<vmem>>, vector<2x1xf32>
    %18 = vector.broadcast %17 : vector<2x1xf32> to vector<2x128xf32>
    %19 = arith.addf %16, %18 : vector<2x128xf32>
    %c0_17 = arith.constant 0 : index
    %c0_18 = arith.constant 0 : index
    %20 = vector.load %arg8[%c0_17, %c0_18] : memref<2x128xf32, #tpu.memory_space<vmem>>, vector<2x128xf32>
    tpu.vector_store %arg8[%c0_17, %c0_18], %19 {strides = array<i32>} : memref<2x128xf32, #tpu.memory_space<vmem>>, vector<2x128xf32>,
    return
  }
  func.func @transform_0(%arg0: i32) -> (i32, i32) {
    %c0_i32 = arith.constant 0 : i32
    %c0_i32_0 = arith.constant 0 : i32
    return %arg0, %c0_i32 : i32, i32
  }
  func.func @transform_1(%arg0: i32) -> (i32, i32) {
    %c0_i32 = arith.constant 0 : i32
    %c0_i32_0 = arith.constant 0 : i32
    %c0_i32_1 = arith.constant 0 : i32
    return %c0_i32, %c0_i32_0 : i32, i32
  }
  func.func @transform_2(%arg0: i32) -> (i32, i32) {
    %c0_i32 = arith.constant 0 : i32
    %c0_i32_0 = arith.constant 0 : i32
    %c0_i32_1 = arith.constant 0 : i32
    return %c0_i32, %c0_i32_0 : i32, i32
  }
  func.func @transform_3(%arg0: i32) -> (i32, i32) {
    %c0_i32 = arith.constant 0 : i32
    %c0_i32_0 = arith.constant 0 : i32
    %c0_i32_1 = arith.constant 0 : i32
    return %c0_i32, %c0_i32_0 : i32, i32
  }
  func.func @transform_4(%arg0: i32) -> (i32, i32) {
    %c0_i32 = arith.constant 0 : i32
    %c0_i32_0 = arith.constant 0 : i32
    %c0_i32_1 = arith.constant 0 : i32
    return %c0_i32, %c0_i32_0 : i32, i32
  }
  func.func @transform_5(%arg0: i32) -> (i32, i32) {
    %c0_i32 = arith.constant 0 : i32
    %c0_i32_0 = arith.constant 0 : i32
    %c0_i32_1 = arith.constant 0 : i32
    return %c0_i32, %c0_i32_0 : i32, i32
  }
  func.func @transform_6(%arg0: i32) -> (i32, i32) {
    %c0_i32 = arith.constant 0 : i32
    %c0_i32_0 = arith.constant 0 : i32
    %c0_i32_1 = arith.constant 0 : i32
    return %c0_i32, %c0_i32_0 : i32, i32
  }
  func.func @transform_7(%arg0: i32) -> (i32, i32) {
    %c0_i32 = arith.constant 0 : i32
    %c0_i32_0 = arith.constant 0 : i32
    return %c0_i32, %arg0 : i32, i32
  }
}

</mosaic_0001>

<llo_original>
// kernel: supervised_nn_forward.1
$region0: #{supervised_nn_forward.1}
  #allocation0 [shape = 'u32[]', space=smem, size = 0x4, offset = 0x4, fixed_abs, tag = 'smem constant byte address 0x4 - core index']
  #allocation1 [shape = 'u32[72,128]{1,0:T(1,128)}', space=vmem, size = 0x9000, scoped, tag = 'internal scratch']
  %s0 = inlined_call_operand.vmem [shape: f32[128,10], index: 0, kind: input, shape index: {}]
  %s1 = inlined_call_operand.vmem [shape: f32[10,10], index: 1, kind: input, shape index: {}]
  %s2 = inlined_call_operand.vmem [shape: f32[10,1], index: 2, kind: input, shape index: {}]
  %s3 = inlined_call_operand.vmem [shape: f32[5,10], index: 3, kind: input, shape index: {}]
  %s4 = inlined_call_operand.vmem [shape: f32[5,1], index: 4, kind: input, shape index: {}]
  %s5 = inlined_call_operand.vmem [shape: f32[2,5], index: 5, kind: input, shape index: {}]
  %s6 = inlined_call_operand.vmem [shape: f32[2,1], index: 6, kind: input, shape index: {}]
  %s7 = inlined_call_operand.vmem [shape: f32[2,128], index: 7, kind: output, shape index: {}]
  %s8 = sld [smem:[#allocation0]]
  $region38: #{supervised_nn_forward.1} parent=0
    _
  %s10 = ssub.s32 1, %s8
  %s11 = scalar_select 0, %s10, %s8
  // Predicated region
  $region2: #{supervised_nn_forward.1} parent=0 // pred_check
    _
  $region3: #{supervised_nn_forward.1} parent=0 // pred_check_branch
    %13 = sbr.rel (0) target = $region5
  $region4: #{supervised_nn_forward.1} parent=0 // pred_region
    _
  $region5: #{supervised_nn_forward.1} parent=0 // pred_fallthru
    _
  // Predicated region
  $region6: #{supervised_nn_forward.1} parent=0 // pred_check
    _
  $region7: #{supervised_nn_forward.1} parent=0 // pred_check_branch
    %15 = sbr.rel (0) target = $region9
  $region8: #{supervised_nn_forward.1} parent=0 // pred_region
    _
  $region9: #{supervised_nn_forward.1} parent=0 // pred_fallthru
    _
  // Predicated region
  $region10: #{supervised_nn_forward.1} parent=0 // pred_check
    _
  $region11: #{supervised_nn_forward.1} parent=0 // pred_check_branch
    %17 = sbr.rel (0) target = $region13
  $region12: #{supervised_nn_forward.1} parent=0 // pred_region
    _
  $region13: #{supervised_nn_forward.1} parent=0 // pred_fallthru
    _
  // Predicated region
  $region14: #{supervised_nn_forward.1} parent=0 // pred_check
    _
  $region15: #{supervised_nn_forward.1} parent=0 // pred_check_branch
    %19 = sbr.rel (0) target = $region17
  $region16: #{supervised_nn_forward.1} parent=0 // pred_region
    _
  $region17: #{supervised_nn_forward.1} parent=0 // pred_fallthru
    _
  // Predicated region
  $region18: #{supervised_nn_forward.1} parent=0 // pred_check
    _
  $region19: #{supervised_nn_forward.1} parent=0 // pred_check_branch
    %21 = sbr.rel (0) target = $region21
  $region20: #{supervised_nn_forward.1} parent=0 // pred_region
    _
  $region21: #{supervised_nn_forward.1} parent=0 // pred_fallthru
    _
  // Predicated region
  $region22: #{supervised_nn_forward.1} parent=0 // pred_check
    _
  $region23: #{supervised_nn_forward.1} parent=0 // pred_check_branch
    %23 = sbr.rel (0) target = $region25
  $region24: #{supervised_nn_forward.1} parent=0 // pred_region
    _
  $region25: #{supervised_nn_forward.1} parent=0 // pred_fallthru
    _
  // Predicated region
  $region26: #{supervised_nn_forward.1} parent=0 // pred_check
    _
  $region27: #{supervised_nn_forward.1} parent=0 // pred_check_branch
    %25 = sbr.rel (0) target = $region29
  $region28: #{supervised_nn_forward.1} parent=0 // pred_region
    _
  $region29: #{supervised_nn_forward.1} parent=0 // pred_fallthru
    _
  %v26 = vld [vmem:[%s0] sm:$0xff]
  %v27 = vld [vmem:[%s0 + $0x8] sm:$0xff]
  %v28 = vld [vmem:[%s0 + $0x10] sm:$0xff]
  %v29 = vld [vmem:[%s0 + $0x18] sm:$0xff]
  %v30 = vld [vmem:[%s0 + $0x20] sm:$0xff]
  %v31 = vld [vmem:[%s0 + $0x28] sm:$0xff]
  %v32 = vld [vmem:[%s0 + $0x30] sm:$0xff]
  %v33 = vld [vmem:[%s0 + $0x38] sm:$0xff]
  %v34 = vld [vmem:[%s0 + $0x40] sm:$0xff]
  %v35 = vld [vmem:[%s0 + $0x48] sm:$0xff]
  %v36 = vld [vmem:[%s0 + $0x50] sm:$0xff]
  %v37 = vld [vmem:[%s0 + $0x58] sm:$0xff]
  %v38 = vld [vmem:[%s0 + $0x60] sm:$0xff]
  %v39 = vld [vmem:[%s0 + $0x68] sm:$0xff]
  %v40 = vld [vmem:[%s0 + $0x70] sm:$0xff]
  %v41 = vld [vmem:[%s0 + $0x78] sm:$0xff]
  %v42 = vld [vmem:[%s1] sm:$0xff]
  %v43 = vld [vmem:[%s1 + $0x8] sm:$0x3]
  %v44 = vld [vmem:[%s2] sm:$0xff]
  %v45 = vld [vmem:[%s2 + $0x8] sm:$0x3]
  %47 = vset.pattern.permute.xlu0 0
  %48 = vperm.xlu0 %47, %v44
  %v49 = vpop.permute.xlu0 %48
  %52 = vset.pattern.permute.xlu0 0
  %53 = vperm.xlu0 %52, %v45
  %v54 = vpop.permute.xlu0 %53
  %vm56 = vcmask 80896
  %v58 = vsel %vm56, %v42, 0
  %v61 = vsel %vm56, %v43, 0
  %v64 = vsel %vm56, %v26, 0
  %v67 = vsel %vm56, %v27, 0
  %v70 = vsel %vm56, %v28, 0
  %v73 = vsel %vm56, %v29, 0
  %v76 = vsel %vm56, %v30, 0
  %v79 = vsel %vm56, %v31, 0
  %v82 = vsel %vm56, %v32, 0
  %v85 = vsel %vm56, %v33, 0
  %v88 = vsel %vm56, %v34, 0
  %v91 = vsel %vm56, %v35, 0
  %v94 = vsel %vm56, %v36, 0
  %v97 = vsel %vm56, %v37, 0
  %v100 = vsel %vm56, %v38, 0
  %v103 = vsel %vm56, %v39, 0
  %v106 = vsel %vm56, %v40, 0
  %v109 = vsel %vm56, %v41, 0
  %111 = vmatpush.xpose.msra.mxu0 %v109
  %112 = vmatpush.xpose.msra.mxu0 %v106
  %113 = vmatpush.xpose.msra.mxu0 %v103
  %114 = vmatpush.xpose.msra.mxu0 %v100
  %115 = vmatpush.xpose.msra.mxu0 %v97
  %116 = vmatpush.xpose.msra.mxu0 %v94
  %117 = vmatpush.xpose.msra.mxu0 %v91
  %118 = vmatpush.xpose.msra.mxu0 %v88
  %119 = vmatpush.xpose.msra.mxu0 %v85
  %120 = vmatpush.xpose.msra.mxu0 %v82
  %121 = vmatpush.xpose.msra.mxu0 %v79
  %122 = vmatpush.xpose.msra.mxu0 %v76
  %123 = vmatpush.xpose.msra.mxu0 %v73
  %124 = vmatpush.xpose.msra.mxu0 %v70
  %125 = vmatpush.xpose.msra.mxu0 %v67
  %126 = vmatpush.xpose.msra.mxu0 %v64
  %127 = vmatmul.f32.gmra.mxu0 %v58
  %v128 = vpop.f32.mrf.mxu0
  %v129 = vadd.f32 %v49, %v128
  %130 = vmatmul.f32.gmra.mxu0 %v61
  %v131 = vpop.f32.mrf.mxu0
  %v132 = vadd.f32 %v54, %v131
  %133 = vdwg.mxu0
  %v134 = vmax.f32 %v129, 0.0
  %v135 = vmax.f32 %v132, 0.0
  %v136 = vld [vmem:[%s3] sm:$0x1f]
  %v137 = vld [vmem:[%s4] sm:$0x1f]
  %139 = vset.pattern.permute.xlu0 0
  %140 = vperm.xlu0 %139, %v137
  %v141 = vpop.permute.xlu0 %140
  %v144 = vsel %vm56, %v136, 0
  %vm146 = vcmask 1041408
  %v148 = vsel %vm146, %v135, 0
  %150 = vmatpush.msra.mxu0 0.0
  %151 = vmatpush.msra.mxu0 0.0
  %152 = vmatpush.msra.mxu0 0.0
  %153 = vmatpush.msra.mxu0 0.0
  %154 = vmatpush.msra.mxu0 0.0
  %155 = vmatpush.msra.mxu0 0.0
  %156 = vmatpush.msra.mxu0 0.0
  %157 = vmatpush.msra.mxu0 0.0
  %158 = vmatpush.msra.mxu0 0.0
  %159 = vmatpush.msra.mxu0 0.0
  %160 = vmatpush.msra.mxu0 0.0
  %161 = vmatpush.msra.mxu0 0.0
  %162 = vmatpush.msra.mxu0 0.0
  %163 = vmatpush.msra.mxu0 0.0
  %164 = vmatpush.msra.mxu0 %v148
  %165 = vmatpush.msra.mxu0 %v134
  %166 = vmatmul.f32.gmra.mxu0 %v144
  %v167 = vpop.f32.mrf.mxu0
  %v168 = vadd.f32 %v141, %v167
  %169 = vdwg.mxu0
  %v170 = vmax.f32 %v168, 0.0
  %v171 = vld [vmem:[%s5] sm:$0x3]
  %v172 = vld [vmem:[%s6] sm:$0x3]
  %174 = vset.pattern.permute.xlu0 0
  %175 = vperm.xlu0 %174, %v172
  %v176 = vpop.permute.xlu0 %175
  %vm178 = vcmask 39936
  %v180 = vsel %vm178, %v171, 0
  %vm182 = vcmask 1044480
  %v184 = vsel %vm182, %v170, 0
  %186 = vmatpush.msra.mxu0 0.0
  %187 = vmatpush.msra.mxu0 0.0
  %188 = vmatpush.msra.mxu0 0.0
  %189 = vmatpush.msra.mxu0 0.0
  %190 = vmatpush.msra.mxu0 0.0
  %191 = vmatpush.msra.mxu0 0.0
  %192 = vmatpush.msra.mxu0 0.0
  %193 = vmatpush.msra.mxu0 0.0
  %194 = vmatpush.msra.mxu0 0.0
  %195 = vmatpush.msra.mxu0 0.0
  %196 = vmatpush.msra.mxu0 0.0
  %197 = vmatpush.msra.mxu0 0.0
  %198 = vmatpush.msra.mxu0 0.0
  %199 = vmatpush.msra.mxu0 0.0
  %200 = vmatpush.msra.mxu0 0.0
  %201 = vmatpush.msra.mxu0 %v184
  %202 = vmatmul.f32.gmra.mxu0 %v180
  %v203 = vpop.f32.mrf.mxu0
  %v204 = vadd.f32 %v176, %v203
  %205 = vdwg.mxu0
  %206 = vst [vmem:[%s7] sm:$0x3] %v204
  // Predicated region
  $region30: #{supervised_nn_forward.1} parent=0 // pred_check
    _
  $region31: #{supervised_nn_forward.1} parent=0 // pred_check_branch
    %208 = sbr.rel (0) target = $region33
  $region32: #{supervised_nn_forward.1} parent=0 // pred_region
    _
  $region33: #{supervised_nn_forward.1} parent=0 // pred_fallthru
    _
  // Predicated region
  $region34: #{supervised_nn_forward.1} parent=0 // pred_check
    _
  $region35: #{supervised_nn_forward.1} parent=0 // pred_check_branch
    %210 = sbr.rel (0) target = $region37
  $region36: #{supervised_nn_forward.1} parent=0 // pred_region
    _
  $region37: #{supervised_nn_forward.1} parent=0 // pred_fallthru
    _

</llo_original>
